<compile_context>
chip_gen: v7x
topology: tpu7x:2x2x1
jax: 0.10.0
libtpu: 0.0.40
codegen_flags: <defaults>
</compile_context>

<pallas_src>
import jax
import jax.numpy as jnp
from jax.experimental import pallas as pl
from jax.experimental.pallas import tpu as pltpu

N_IN, H1, H2, N_OUT = 10, 5, 2, 1
SUB = 8  # f32 sublanes per vreg


def _sigmoid_eup(z):
    # sigmoid(z) == 0.5 * (tanh(z / 2) + 1).  tanh lowers to one EUP op,
    # keeping the divide/select work of jax.nn.sigmoid off the VALU.
    return 0.5 * jnp.tanh(0.5 * z) + 0.5


def _mlp_kernel(x_ref, w1_ref, b1_ref, w2_ref, b2_ref, w3_ref, b3_ref, o_ref):
    """Fused 3-layer MLP on one batch tile.

    x_ref : (N_IN, 8, tile_n) f32 VMEM — x_ref[k] is a dense (8, tile_n) tile
            holding tile_b = 8*tile_n batch elements of input feature k.
    w*_ref: (out, in) f32 SMEM,  b*_ref: (out,) f32 SMEM (scalar broadcasts).
    o_ref : (N_OUT, 8, tile_n) f32 VMEM (dense output tile).
    """

    def dense_sigmoid(feats, w_ref, b_ref, n_out):
        outs = []
        for j in range(n_out):
            acc = feats[0] * w_ref[j, 0]
            for k in range(1, len(feats)):
                acc = acc + feats[k] * w_ref[j, k]
            outs.append(_sigmoid_eup(acc + b_ref[j]))
        return outs

    x_feats = [x_ref[k] for k in range(N_IN)]          # dense (8, tile_n) slices
    h1 = dense_sigmoid(x_feats, w1_ref, b1_ref, H1)
    h2 = dense_sigmoid(h1, w2_ref, b2_ref, H2)
    h3 = dense_sigmoid(h2, w3_ref, b3_ref, N_OUT)
    for j in range(N_OUT):
        o_ref[j] = h3[j].astype(o_ref.dtype)


def _round_up(n, m):
    return ((n + m - 1) // m) * m


def mlp_forward(x, params, *, tile_b=16384):
    """x: [B, 10] f32 (PyTorch layout). params: w* as [out, in], b* as [out].
    Returns [B, 1] f32."""
    w1, b1 = params["w1"], params["b1"]
    w2, b2 = params["w2"], params["b2"]
    w3, b3 = params["w3"], params["b3"]
    B = x.shape[0]

    # A tile holds tile_b = 8 * tile_n batch elements; tile_n must be a
    # multiple of 128 lanes, so tile_b is a multiple of 1024.
    tile_b = max(1024, min(_round_up(tile_b, 1024), _round_up(B, 1024)))
    b_pad = _round_up(B, tile_b)
    lanes = b_pad // SUB                # total lane extent of the 3-D layout
    tile_n = tile_b // SUB              # lanes per grid step (multiple of 128)
    grid = (b_pad // tile_b,)

    # Relayout [B, 10] -> padded, feature-major, sublane-dense [10, 8, lanes].
    # Batch element b lives at (s, l) = (b // lanes, b % lanes).  With
    # allow_input_fusion below, XLA may fuse this producer into the
    # pallas_call operand instead of materializing an extra HBM round trip.
    x3 = jnp.pad(x, ((0, b_pad - B), (0, 0))).T.reshape(N_IN, SUB, lanes)

    smem = pl.BlockSpec(memory_space=pltpu.MemorySpace.SMEM)
    cost = pl.CostEstimate(
        flops=2 * b_pad * (N_IN * H1 + H1 * H2 + H2 * N_OUT),
        transcendentals=b_pad * (H1 + H2 + N_OUT),
        bytes_accessed=4 * b_pad * (N_IN + N_OUT),
    )

    out3 = pl.pallas_call(
        _mlp_kernel,
        out_shape=jax.ShapeDtypeStruct((N_OUT, SUB, lanes), jnp.float32),
        grid=grid,
        in_specs=[
            pl.BlockSpec((N_IN, SUB, tile_n), lambda i: (0, 0, i)),  # x tile
            smem, smem,                                              # w1, b1
            smem, smem,                                              # w2, b2
            smem, smem,                                              # w3, b3
        ],
        out_specs=pl.BlockSpec((N_OUT, SUB, tile_n), lambda i: (0, 0, i)),
        compiler_params=pltpu.CompilerParams(
            dimension_semantics=("parallel",),
            allow_input_fusion=[True, False, False, False, False, False, False],
        ),
        cost_estimate=cost,
    )(x3, w1, b1, w2, b2, w3, b3)

    # Inverse relayout (exact inverse of the input reshape): (1, 8, lanes) ->
    # (1, b_pad) -> (b_pad, 1) -> [B, 1].  Padded garbage is sliced off.
    return out3.reshape(N_OUT, b_pad).T[:B]


def init_params(key):
    """Deterministic init matching nn.Linear (w stored as [out, in], b as [out])."""
    ks = jax.random.split(key, 6)

    def linear(kw, kb, fan_in, fan_out):
        # PyTorch default init: U(-1/sqrt(fan_in), 1/sqrt(fan_in))
        bound = 1.0 / float(fan_in) ** 0.5
        w = jax.random.uniform(kw, (fan_out, fan_in), jnp.float32, -bound, bound)
        b = jax.random.uniform(kb, (fan_out,), jnp.float32, -bound, bound)
        return w, b

    w1, b1 = linear(ks[0], ks[1], N_IN, H1)
    w2, b2 = linear(ks[2], ks[3], H1, H2)
    w3, b3 = linear(ks[4], ks[5], H2, N_OUT)
    return {"w1": w1, "b1": b1, "w2": w2, "b2": b2, "w3": w3, "b3": b3}


def mlp_reference(x, p):
    h = jax.nn.sigmoid(x @ p["w1"].T + p["b1"])
    h = jax.nn.sigmoid(h @ p["w2"].T + p["b2"])
    h = jax.nn.sigmoid(h @ p["w3"].T + p["b3"])
    return h


if __name__ == "__main__":
    key = jax.random.PRNGKey(0)
    k_x, k_p = jax.random.split(key)

    B = 8
    x = jax.random.normal(k_x, (B, N_IN), dtype=jnp.float32)
    params = init_params(k_p)

    out = jax.block_until_ready(jax.jit(mlp_forward)(x, params))

    ref = mlp_reference(x, params)
    assert out.shape == (B, N_OUT), out.shape
    assert jnp.allclose(out, ref, atol=1e-5, rtol=1e-5)

    print("KERNEL_OK")
</pallas_src>

<mosaic_0001>
module attributes {stable_mosaic.version = 11 : i64} {
  func.func @_mlp_kernel(%arg0: i32, %arg1: memref<10x8x128xf32, #tpu.memory_space<vmem>>, %arg2: memref<5x10xf32, #tpu.memory_space<smem>>, %arg3: memref<5xf32, #tpu.memory_space<smem>>, %arg4: memref<2x5xf32, #tpu.memory_space<smem>>, %arg5: memref<2xf32, #tpu.memory_space<smem>>, %arg6: memref<1x2xf32, #tpu.memory_space<smem>>, %arg7: memref<1xf32, #tpu.memory_space<smem>>, %arg8: memref<1x8x128xf32, #tpu.memory_space<vmem>>) attributes {dimension_semantics = [#tpu.dimension_semantics<parallel>], iteration_bounds = array<i64: 1>, scalar_prefetch = 0 : i64, scratch_operands = 0 : i64, tpu.core_type = #tpu.core_type<tc>, window_params = [{transform_indices = @transform_0, window_bounds = array<i64: 10, 8, 128>}, {transform_indices = @transform_1, window_bounds = array<i64: 5, 10>}, {transform_indices = @transform_2, window_bounds = array<i64: 5>}, {transform_indices = @transform_3, window_bounds = array<i64: 2, 5>}, {transform_indices = @transform_4, window_bounds = array<i64: 2>}, {transform_indices = @transform_5, window_bounds = array<i64: 1, 2>}, {transform_indices = @transform_6, window_bounds = array<i64: 1>}, {transform_indices = @transform_7, window_bounds = array<i64: 1, 8, 128>}]} {
    %c0 = arith.constant 0 : index
    %c0_0 = arith.constant 0 : index
    %c0_1 = arith.constant 0 : index
    %0 = vector.load %arg1[%c0, %c0_0, %c0_1] : memref<10x8x128xf32, #tpu.memory_space<vmem>>, vector<1x8x128xf32>
    %1 = vector.shape_cast %0 : vector<1x8x128xf32> to vector<8x128xf32>
    %c1 = arith.constant 1 : index
    %c0_2 = arith.constant 0 : index
    %c0_3 = arith.constant 0 : index
    %2 = vector.load %arg1[%c1, %c0_2, %c0_3] : memref<10x8x128xf32, #tpu.memory_space<vmem>>, vector<1x8x128xf32>
    %3 = vector.shape_cast %2 : vector<1x8x128xf32> to vector<8x128xf32>
    %c2 = arith.constant 2 : index
    %c0_4 = arith.constant 0 : index
    %c0_5 = arith.constant 0 : index
    %4 = vector.load %arg1[%c2, %c0_4, %c0_5] : memref<10x8x128xf32, #tpu.memory_space<vmem>>, vector<1x8x128xf32>
    %5 = vector.shape_cast %4 : vector<1x8x128xf32> to vector<8x128xf32>
    %c3 = arith.constant 3 : index
    %c0_6 = arith.constant 0 : index
    %c0_7 = arith.constant 0 : index
    %6 = vector.load %arg1[%c3, %c0_6, %c0_7] : memref<10x8x128xf32, #tpu.memory_space<vmem>>, vector<1x8x128xf32>
    %7 = vector.shape_cast %6 : vector<1x8x128xf32> to vector<8x128xf32>
    %c4 = arith.constant 4 : index
    %c0_8 = arith.constant 0 : index
    %c0_9 = arith.constant 0 : index
    %8 = vector.load %arg1[%c4, %c0_8, %c0_9] : memref<10x8x128xf32, #tpu.memory_space<vmem>>, vector<1x8x128xf32>
    %9 = vector.shape_cast %8 : vector<1x8x128xf32> to vector<8x128xf32>
    %c5 = arith.constant 5 : index
    %c0_10 = arith.constant 0 : index
    %c0_11 = arith.constant 0 : index
    %10 = vector.load %arg1[%c5, %c0_10, %c0_11] : memref<10x8x128xf32, #tpu.memory_space<vmem>>, vector<1x8x128xf32>
    %11 = vector.shape_cast %10 : vector<1x8x128xf32> to vector<8x128xf32>
    %c6 = arith.constant 6 : index
    %c0_12 = arith.constant 0 : index
    %c0_13 = arith.constant 0 : index
    %12 = vector.load %arg1[%c6, %c0_12, %c0_13] : memref<10x8x128xf32, #tpu.memory_space<vmem>>, vector<1x8x128xf32>
    %13 = vector.shape_cast %12 : vector<1x8x128xf32> to vector<8x128xf32>
    %c7 = arith.constant 7 : index
    %c0_14 = arith.constant 0 : index
    %c0_15 = arith.constant 0 : index
    %14 = vector.load %arg1[%c7, %c0_14, %c0_15] : memref<10x8x128xf32, #tpu.memory_space<vmem>>, vector<1x8x128xf32>
    %15 = vector.shape_cast %14 : vector<1x8x128xf32> to vector<8x128xf32>
    %c8 = arith.constant 8 : index
    %c0_16 = arith.constant 0 : index
    %c0_17 = arith.constant 0 : index
    %16 = vector.load %arg1[%c8, %c0_16, %c0_17] : memref<10x8x128xf32, #tpu.memory_space<vmem>>, vector<1x8x128xf32>
    %17 = vector.shape_cast %16 : vector<1x8x128xf32> to vector<8x128xf32>
    %c9 = arith.constant 9 : index
    %c0_18 = arith.constant 0 : index
    %c0_19 = arith.constant 0 : index
    %18 = vector.load %arg1[%c9, %c0_18, %c0_19] : memref<10x8x128xf32, #tpu.memory_space<vmem>>, vector<1x8x128xf32>
    %19 = vector.shape_cast %18 : vector<1x8x128xf32> to vector<8x128xf32>
    %c0_20 = arith.constant 0 : index
    %c0_21 = arith.constant 0 : index
    %20 = memref.load %arg2[%c0_20, %c0_21] : memref<5x10xf32, #tpu.memory_space<smem>>
    %21 = vector.broadcast %20 : f32 to vector<8x128xf32>
    %22 = arith.mulf %1, %21 : vector<8x128xf32>
    %c0_22 = arith.constant 0 : index
    %c1_23 = arith.constant 1 : index
    %23 = memref.load %arg2[%c0_22, %c1_23] : memref<5x10xf32, #tpu.memory_space<smem>>
    %24 = vector.broadcast %23 : f32 to vector<8x128xf32>
    %25 = arith.mulf %3, %24 : vector<8x128xf32>
    %26 = arith.addf %22, %25 : vector<8x128xf32>
    %c0_24 = arith.constant 0 : index
    %c2_25 = arith.constant 2 : index
    %27 = memref.load %arg2[%c0_24, %c2_25] : memref<5x10xf32, #tpu.memory_space<smem>>
    %28 = vector.broadcast %27 : f32 to vector<8x128xf32>
    %29 = arith.mulf %5, %28 : vector<8x128xf32>
    %30 = arith.addf %26, %29 : vector<8x128xf32>
    %c0_26 = arith.constant 0 : index
    %c3_27 = arith.constant 3 : index
    %31 = memref.load %arg2[%c0_26, %c3_27] : memref<5x10xf32, #tpu.memory_space<smem>>
    %32 = vector.broadcast %31 : f32 to vector<8x128xf32>
    %33 = arith.mulf %7, %32 : vector<8x128xf32>
    %34 = arith.addf %30, %33 : vector<8x128xf32>
    %c0_28 = arith.constant 0 : index
    %c4_29 = arith.constant 4 : index
    %35 = memref.load %arg2[%c0_28, %c4_29] : memref<5x10xf32, #tpu.memory_space<smem>>
    %36 = vector.broadcast %35 : f32 to vector<8x128xf32>
    %37 = arith.mulf %9, %36 : vector<8x128xf32>
    %38 = arith.addf %34, %37 : vector<8x128xf32>
    %c0_30 = arith.constant 0 : index
    %c5_31 = arith.constant 5 : index
    %39 = memref.load %arg2[%c0_30, %c5_31] : memref<5x10xf32, #tpu.memory_space<smem>>
    %40 = vector.broadcast %39 : f32 to vector<8x128xf32>
    %41 = arith.mulf %11, %40 : vector<8x128xf32>
    %42 = arith.addf %38, %41 : vector<8x128xf32>
    %c0_32 = arith.constant 0 : index
    %c6_33 = arith.constant 6 : index
    %43 = memref.load %arg2[%c0_32, %c6_33] : memref<5x10xf32, #tpu.memory_space<smem>>
    %44 = vector.broadcast %43 : f32 to vector<8x128xf32>
    %45 = arith.mulf %13, %44 : vector<8x128xf32>
    %46 = arith.addf %42, %45 : vector<8x128xf32>
    %c0_34 = arith.constant 0 : index
    %c7_35 = arith.constant 7 : index
    %47 = memref.load %arg2[%c0_34, %c7_35] : memref<5x10xf32, #tpu.memory_space<smem>>
    %48 = vector.broadcast %47 : f32 to vector<8x128xf32>
    %49 = arith.mulf %15, %48 : vector<8x128xf32>
    %50 = arith.addf %46, %49 : vector<8x128xf32>
    %c0_36 = arith.constant 0 : index
    %c8_37 = arith.constant 8 : index
    %51 = memref.load %arg2[%c0_36, %c8_37] : memref<5x10xf32, #tpu.memory_space<smem>>
    %52 = vector.broadcast %51 : f32 to vector<8x128xf32>
    %53 = arith.mulf %17, %52 : vector<8x128xf32>
    %54 = arith.addf %50, %53 : vector<8x128xf32>
    %c0_38 = arith.constant 0 : index
    %c9_39 = arith.constant 9 : index
    %55 = memref.load %arg2[%c0_38, %c9_39] : memref<5x10xf32, #tpu.memory_space<smem>>
    %56 = vector.broadcast %55 : f32 to vector<8x128xf32>
    %57 = arith.mulf %19, %56 : vector<8x128xf32>
    %58 = arith.addf %54, %57 : vector<8x128xf32>
    %c0_40 = arith.constant 0 : index
    %59 = memref.load %arg3[%c0_40] : memref<5xf32, #tpu.memory_space<smem>>
    %60 = vector.broadcast %59 : f32 to vector<8x128xf32>
    %61 = arith.addf %58, %60 : vector<8x128xf32>
    %cst = arith.constant 5.000000e-01 : f32
    %62 = vector.broadcast %cst : f32 to vector<8x128xf32>
    %63 = arith.mulf %62, %61 : vector<8x128xf32>
    %64 = math.tanh %63 : vector<8x128xf32>
    %cst_41 = arith.constant 5.000000e-01 : f32
    %65 = vector.broadcast %cst_41 : f32 to vector<8x128xf32>
    %66 = arith.mulf %65, %64 : vector<8x128xf32>
    %cst_42 = arith.constant 5.000000e-01 : f32
    %67 = vector.broadcast %cst_42 : f32 to vector<8x128xf32>
    %68 = arith.addf %66, %67 : vector<8x128xf32>
    %c1_43 = arith.constant 1 : index
    %c0_44 = arith.constant 0 : index
    %69 = memref.load %arg2[%c1_43, %c0_44] : memref<5x10xf32, #tpu.memory_space<smem>>
    %70 = vector.broadcast %69 : f32 to vector<8x128xf32>
    %71 = arith.mulf %1, %70 : vector<8x128xf32>
    %c1_45 = arith.constant 1 : index
    %c1_46 = arith.constant 1 : index
    %72 = memref.load %arg2[%c1_45, %c1_46] : memref<5x10xf32, #tpu.memory_space<smem>>
    %73 = vector.broadcast %72 : f32 to vector<8x128xf32>
    %74 = arith.mulf %3, %73 : vector<8x128xf32>
    %75 = arith.addf %71, %74 : vector<8x128xf32>
    %c1_47 = arith.constant 1 : index
    %c2_48 = arith.constant 2 : index
    %76 = memref.load %arg2[%c1_47, %c2_48] : memref<5x10xf32, #tpu.memory_space<smem>>
    %77 = vector.broadcast %76 : f32 to vector<8x128xf32>
    %78 = arith.mulf %5, %77 : vector<8x128xf32>
    %79 = arith.addf %75, %78 : vector<8x128xf32>
    %c1_49 = arith.constant 1 : index
    %c3_50 = arith.constant 3 : index
    %80 = memref.load %arg2[%c1_49, %c3_50] : memref<5x10xf32, #tpu.memory_space<smem>>
    %81 = vector.broadcast %80 : f32 to vector<8x128xf32>
    %82 = arith.mulf %7, %81 : vector<8x128xf32>
    %83 = arith.addf %79, %82 : vector<8x128xf32>
    %c1_51 = arith.constant 1 : index
    %c4_52 = arith.constant 4 : index
    %84 = memref.load %arg2[%c1_51, %c4_52] : memref<5x10xf32, #tpu.memory_space<smem>>
    %85 = vector.broadcast %84 : f32 to vector<8x128xf32>
    %86 = arith.mulf %9, %85 : vector<8x128xf32>
    %87 = arith.addf %83, %86 : vector<8x128xf32>
    %c1_53 = arith.constant 1 : index
    %c5_54 = arith.constant 5 : index
    %88 = memref.load %arg2[%c1_53, %c5_54] : memref<5x10xf32, #tpu.memory_space<smem>>
    %89 = vector.broadcast %88 : f32 to vector<8x128xf32>
    %90 = arith.mulf %11, %89 : vector<8x128xf32>
    %91 = arith.addf %87, %90 : vector<8x128xf32>
    %c1_55 = arith.constant 1 : index
    %c6_56 = arith.constant 6 : index
    %92 = memref.load %arg2[%c1_55, %c6_56] : memref<5x10xf32, #tpu.memory_space<smem>>
    %93 = vector.broadcast %92 : f32 to vector<8x128xf32>
    %94 = arith.mulf %13, %93 : vector<8x128xf32>
    %95 = arith.addf %91, %94 : vector<8x128xf32>
    %c1_57 = arith.constant 1 : index
    %c7_58 = arith.constant 7 : index
    %96 = memref.load %arg2[%c1_57, %c7_58] : memref<5x10xf32, #tpu.memory_space<smem>>
    %97 = vector.broadcast %96 : f32 to vector<8x128xf32>
    %98 = arith.mulf %15, %97 : vector<8x128xf32>
    %99 = arith.addf %95, %98 : vector<8x128xf32>
    %c1_59 = arith.constant 1 : index
    %c8_60 = arith.constant 8 : index
    %100 = memref.load %arg2[%c1_59, %c8_60] : memref<5x10xf32, #tpu.memory_space<smem>>
    %101 = vector.broadcast %100 : f32 to vector<8x128xf32>
    %102 = arith.mulf %17, %101 : vector<8x128xf32>
    %103 = arith.addf %99, %102 : vector<8x128xf32>
    %c1_61 = arith.constant 1 : index
    %c9_62 = arith.constant 9 : index
    %104 = memref.load %arg2[%c1_61, %c9_62] : memref<5x10xf32, #tpu.memory_space<smem>>
    %105 = vector.broadcast %104 : f32 to vector<8x128xf32>
    %106 = arith.mulf %19, %105 : vector<8x128xf32>
    %107 = arith.addf %103, %106 : vector<8x128xf32>
    %c1_63 = arith.constant 1 : index
    %108 = memref.load %arg3[%c1_63] : memref<5xf32, #tpu.memory_space<smem>>
    %109 = vector.broadcast %108 : f32 to vector<8x128xf32>
    %110 = arith.addf %107, %109 : vector<8x128xf32>
    %cst_64 = arith.constant 5.000000e-01 : f32
    %111 = vector.broadcast %cst_64 : f32 to vector<8x128xf32>
    %112 = arith.mulf %111, %110 : vector<8x128xf32>
    %113 = math.tanh %112 : vector<8x128xf32>
    %cst_65 = arith.constant 5.000000e-01 : f32
    %114 = vector.broadcast %cst_65 : f32 to vector<8x128xf32>
    %115 = arith.mulf %114, %113 : vector<8x128xf32>
    %cst_66 = arith.constant 5.000000e-01 : f32
    %116 = vector.broadcast %cst_66 : f32 to vector<8x128xf32>
    %117 = arith.addf %115, %116 : vector<8x128xf32>
    %c2_67 = arith.constant 2 : index
    %c0_68 = arith.constant 0 : index
    %118 = memref.load %arg2[%c2_67, %c0_68] : memref<5x10xf32, #tpu.memory_space<smem>>
    %119 = vector.broadcast %118 : f32 to vector<8x128xf32>
    %120 = arith.mulf %1, %119 : vector<8x128xf32>
    %c2_69 = arith.constant 2 : index
    %c1_70 = arith.constant 1 : index
    %121 = memref.load %arg2[%c2_69, %c1_70] : memref<5x10xf32, #tpu.memory_space<smem>>
    %122 = vector.broadcast %121 : f32 to vector<8x128xf32>
    %123 = arith.mulf %3, %122 : vector<8x128xf32>
    %124 = arith.addf %120, %123 : vector<8x128xf32>
    %c2_71 = arith.constant 2 : index
    %c2_72 = arith.constant 2 : index
    %125 = memref.load %arg2[%c2_71, %c2_72] : memref<5x10xf32, #tpu.memory_space<smem>>
    %126 = vector.broadcast %125 : f32 to vector<8x128xf32>
    %127 = arith.mulf %5, %126 : vector<8x128xf32>
    %128 = arith.addf %124, %127 : vector<8x128xf32>
    %c2_73 = arith.constant 2 : index
    %c3_74 = arith.constant 3 : index
    %129 = memref.load %arg2[%c2_73, %c3_74] : memref<5x10xf32, #tpu.memory_space<smem>>
    %130 = vector.broadcast %129 : f32 to vector<8x128xf32>
    %131 = arith.mulf %7, %130 : vector<8x128xf32>
    %132 = arith.addf %128, %131 : vector<8x128xf32>
    %c2_75 = arith.constant 2 : index
    %c4_76 = arith.constant 4 : index
    %133 = memref.load %arg2[%c2_75, %c4_76] : memref<5x10xf32, #tpu.memory_space<smem>>
    %134 = vector.broadcast %133 : f32 to vector<8x128xf32>
    %135 = arith.mulf %9, %134 : vector<8x128xf32>
    %136 = arith.addf %132, %135 : vector<8x128xf32>
    %c2_77 = arith.constant 2 : index
    %c5_78 = arith.constant 5 : index
    %137 = memref.load %arg2[%c2_77, %c5_78] : memref<5x10xf32, #tpu.memory_space<smem>>
    %138 = vector.broadcast %137 : f32 to vector<8x128xf32>
    %139 = arith.mulf %11, %138 : vector<8x128xf32>
    %140 = arith.addf %136, %139 : vector<8x128xf32>
    %c2_79 = arith.constant 2 : index
    %c6_80 = arith.constant 6 : index
    %141 = memref.load %arg2[%c2_79, %c6_80] : memref<5x10xf32, #tpu.memory_space<smem>>
    %142 = vector.broadcast %141 : f32 to vector<8x128xf32>
    %143 = arith.mulf %13, %142 : vector<8x128xf32>
    %144 = arith.addf %140, %143 : vector<8x128xf32>
    %c2_81 = arith.constant 2 : index
    %c7_82 = arith.constant 7 : index
    %145 = memref.load %arg2[%c2_81, %c7_82] : memref<5x10xf32, #tpu.memory_space<smem>>
    %146 = vector.broadcast %145 : f32 to vector<8x128xf32>
    %147 = arith.mulf %15, %146 : vector<8x128xf32>
    %148 = arith.addf %144, %147 : vector<8x128xf32>
    %c2_83 = arith.constant 2 : index
    %c8_84 = arith.constant 8 : index
    %149 = memref.load %arg2[%c2_83, %c8_84] : memref<5x10xf32, #tpu.memory_space<smem>>
    %150 = vector.broadcast %149 : f32 to vector<8x128xf32>
    %151 = arith.mulf %17, %150 : vector<8x128xf32>
    %152 = arith.addf %148, %151 : vector<8x128xf32>
    %c2_85 = arith.constant 2 : index
    %c9_86 = arith.constant 9 : index
    %153 = memref.load %arg2[%c2_85, %c9_86] : memref<5x10xf32, #tpu.memory_space<smem>>
    %154 = vector.broadcast %153 : f32 to vector<8x128xf32>
    %155 = arith.mulf %19, %154 : vector<8x128xf32>
    %156 = arith.addf %152, %155 : vector<8x128xf32>
    %c2_87 = arith.constant 2 : index
    %157 = memref.load %arg3[%c2_87] : memref<5xf32, #tpu.memory_space<smem>>
    %158 = vector.broadcast %157 : f32 to vector<8x128xf32>
    %159 = arith.addf %156, %158 : vector<8x128xf32>
    %cst_88 = arith.constant 5.000000e-01 : f32
    %160 = vector.broadcast %cst_88 : f32 to vector<8x128xf32>
    %161 = arith.mulf %160, %159 : vector<8x128xf32>
    %162 = math.tanh %161 : vector<8x128xf32>
    %cst_89 = arith.constant 5.000000e-01 : f32
    %163 = vector.broadcast %cst_89 : f32 to vector<8x128xf32>
    %164 = arith.mulf %163, %162 : vector<8x128xf32>
    %cst_90 = arith.constant 5.000000e-01 : f32
    %165 = vector.broadcast %cst_90 : f32 to vector<8x128xf32>
    %166 = arith.addf %164, %165 : vector<8x128xf32>
    %c3_91 = arith.constant 3 : index
    %c0_92 = arith.constant 0 : index
    %167 = memref.load %arg2[%c3_91, %c0_92] : memref<5x10xf32, #tpu.memory_space<smem>>
    %168 = vector.broadcast %167 : f32 to vector<8x128xf32>
    %169 = arith.mulf %1, %168 : vector<8x128xf32>
    %c3_93 = arith.constant 3 : index
    %c1_94 = arith.constant 1 : index
    %170 = memref.load %arg2[%c3_93, %c1_94] : memref<5x10xf32, #tpu.memory_space<smem>>
    %171 = vector.broadcast %170 : f32 to vector<8x128xf32>
    %172 = arith.mulf %3, %171 : vector<8x128xf32>
    %173 = arith.addf %169, %172 : vector<8x128xf32>
    %c3_95 = arith.constant 3 : index
    %c2_96 = arith.constant 2 : index
    %174 = memref.load %arg2[%c3_95, %c2_96] : memref<5x10xf32, #tpu.memory_space<smem>>
    %175 = vector.broadcast %174 : f32 to vector<8x128xf32>
    %176 = arith.mulf %5, %175 : vector<8x128xf32>
    %177 = arith.addf %173, %176 : vector<8x128xf32>
    %c3_97 = arith.constant 3 : index
    %c3_98 = arith.constant 3 : index
    %178 = memref.load %arg2[%c3_97, %c3_98] : memref<5x10xf32, #tpu.memory_space<smem>>
    %179 = vector.broadcast %178 : f32 to vector<8x128xf32>
    %180 = arith.mulf %7, %179 : vector<8x128xf32>
    %181 = arith.addf %177, %180 : vector<8x128xf32>
    %c3_99 = arith.constant 3 : index
    %c4_100 = arith.constant 4 : index
    %182 = memref.load %arg2[%c3_99, %c4_100] : memref<5x10xf32, #tpu.memory_space<smem>>
    %183 = vector.broadcast %182 : f32 to vector<8x128xf32>
    %184 = arith.mulf %9, %183 : vector<8x128xf32>
    %185 = arith.addf %181, %184 : vector<8x128xf32>
    %c3_101 = arith.constant 3 : index
    %c5_102 = arith.constant 5 : index
    %186 = memref.load %arg2[%c3_101, %c5_102] : memref<5x10xf32, #tpu.memory_space<smem>>
    %187 = vector.broadcast %186 : f32 to vector<8x128xf32>
    %188 = arith.mulf %11, %187 : vector<8x128xf32>
    %189 = arith.addf %185, %188 : vector<8x128xf32>
    %c3_103 = arith.constant 3 : index
    %c6_104 = arith.constant 6 : index
    %190 = memref.load %arg2[%c3_103, %c6_104] : memref<5x10xf32, #tpu.memory_space<smem>>
    %191 = vector.broadcast %190 : f32 to vector<8x128xf32>
    %192 = arith.mulf %13, %191 : vector<8x128xf32>
    %193 = arith.addf %189, %192 : vector<8x128xf32>
    %c3_105 = arith.constant 3 : index
    %c7_106 = arith.constant 7 : index
    %194 = memref.load %arg2[%c3_105, %c7_106] : memref<5x10xf32, #tpu.memory_space<smem>>
    %195 = vector.broadcast %194 : f32 to vector<8x128xf32>
    %196 = arith.mulf %15, %195 : vector<8x128xf32>
    %197 = arith.addf %193, %196 : vector<8x128xf32>
    %c3_107 = arith.constant 3 : index
    %c8_108 = arith.constant 8 : index
    %198 = memref.load %arg2[%c3_107, %c8_108] : memref<5x10xf32, #tpu.memory_space<smem>>
    %199 = vector.broadcast %198 : f32 to vector<8x128xf32>
    %200 = arith.mulf %17, %199 : vector<8x128xf32>
    %201 = arith.addf %197, %200 : vector<8x128xf32>
    %c3_109 = arith.constant 3 : index
    %c9_110 = arith.constant 9 : index
    %202 = memref.load %arg2[%c3_109, %c9_110] : memref<5x10xf32, #tpu.memory_space<smem>>
    %203 = vector.broadcast %202 : f32 to vector<8x128xf32>
    %204 = arith.mulf %19, %203 : vector<8x128xf32>
    %205 = arith.addf %201, %204 : vector<8x128xf32>
    %c3_111 = arith.constant 3 : index
    %206 = memref.load %arg3[%c3_111] : memref<5xf32, #tpu.memory_space<smem>>
    %207 = vector.broadcast %206 : f32 to vector<8x128xf32>
    %208 = arith.addf %205, %207 : vector<8x128xf32>
    %cst_112 = arith.constant 5.000000e-01 : f32
    %209 = vector.broadcast %cst_112 : f32 to vector<8x128xf32>
    %210 = arith.mulf %209, %208 : vector<8x128xf32>
    %211 = math.tanh %210 : vector<8x128xf32>
    %cst_113 = arith.constant 5.000000e-01 : f32
    %212 = vector.broadcast %cst_113 : f32 to vector<8x128xf32>
    %213 = arith.mulf %212, %211 : vector<8x128xf32>
    %cst_114 = arith.constant 5.000000e-01 : f32
    %214 = vector.broadcast %cst_114 : f32 to vector<8x128xf32>
    %215 = arith.addf %213, %214 : vector<8x128xf32>
    %c4_115 = arith.constant 4 : index
    %c0_116 = arith.constant 0 : index
    %216 = memref.load %arg2[%c4_115, %c0_116] : memref<5x10xf32, #tpu.memory_space<smem>>
    %217 = vector.broadcast %216 : f32 to vector<8x128xf32>
    %218 = arith.mulf %1, %217 : vector<8x128xf32>
    %c4_117 = arith.constant 4 : index
    %c1_118 = arith.constant 1 : index
    %219 = memref.load %arg2[%c4_117, %c1_118] : memref<5x10xf32, #tpu.memory_space<smem>>
    %220 = vector.broadcast %219 : f32 to vector<8x128xf32>
    %221 = arith.mulf %3, %220 : vector<8x128xf32>
    %222 = arith.addf %218, %221 : vector<8x128xf32>
    %c4_119 = arith.constant 4 : index
    %c2_120 = arith.constant 2 : index
    %223 = memref.load %arg2[%c4_119, %c2_120] : memref<5x10xf32, #tpu.memory_space<smem>>
    %224 = vector.broadcast %223 : f32 to vector<8x128xf32>
    %225 = arith.mulf %5, %224 : vector<8x128xf32>
    %226 = arith.addf %222, %225 : vector<8x128xf32>
    %c4_121 = arith.constant 4 : index
    %c3_122 = arith.constant 3 : index
    %227 = memref.load %arg2[%c4_121, %c3_122] : memref<5x10xf32, #tpu.memory_space<smem>>
    %228 = vector.broadcast %227 : f32 to vector<8x128xf32>
    %229 = arith.mulf %7, %228 : vector<8x128xf32>
    %230 = arith.addf %226, %229 : vector<8x128xf32>
    %c4_123 = arith.constant 4 : index
    %c4_124 = arith.constant 4 : index
    %231 = memref.load %arg2[%c4_123, %c4_124] : memref<5x10xf32, #tpu.memory_space<smem>>
    %232 = vector.broadcast %231 : f32 to vector<8x128xf32>
    %233 = arith.mulf %9, %232 : vector<8x128xf32>
    %234 = arith.addf %230, %233 : vector<8x128xf32>
    %c4_125 = arith.constant 4 : index
    %c5_126 = arith.constant 5 : index
    %235 = memref.load %arg2[%c4_125, %c5_126] : memref<5x10xf32, #tpu.memory_space<smem>>
    %236 = vector.broadcast %235 : f32 to vector<8x128xf32>
    %237 = arith.mulf %11, %236 : vector<8x128xf32>
    %238 = arith.addf %234, %237 : vector<8x128xf32>
    %c4_127 = arith.constant 4 : index
    %c6_128 = arith.constant 6 : index
    %239 = memref.load %arg2[%c4_127, %c6_128] : memref<5x10xf32, #tpu.memory_space<smem>>
    %240 = vector.broadcast %239 : f32 to vector<8x128xf32>
    %241 = arith.mulf %13, %240 : vector<8x128xf32>
    %242 = arith.addf %238, %241 : vector<8x128xf32>
    %c4_129 = arith.constant 4 : index
    %c7_130 = arith.constant 7 : index
    %243 = memref.load %arg2[%c4_129, %c7_130] : memref<5x10xf32, #tpu.memory_space<smem>>
    %244 = vector.broadcast %243 : f32 to vector<8x128xf32>
    %245 = arith.mulf %15, %244 : vector<8x128xf32>
    %246 = arith.addf %242, %245 : vector<8x128xf32>
    %c4_131 = arith.constant 4 : index
    %c8_132 = arith.constant 8 : index
    %247 = memref.load %arg2[%c4_131, %c8_132] : memref<5x10xf32, #tpu.memory_space<smem>>
    %248 = vector.broadcast %247 : f32 to vector<8x128xf32>
    %249 = arith.mulf %17, %248 : vector<8x128xf32>
    %250 = arith.addf %246, %249 : vector<8x128xf32>
    %c4_133 = arith.constant 4 : index
    %c9_134 = arith.constant 9 : index
    %251 = memref.load %arg2[%c4_133, %c9_134] : memref<5x10xf32, #tpu.memory_space<smem>>
    %252 = vector.broadcast %251 : f32 to vector<8x128xf32>
    %253 = arith.mulf %19, %252 : vector<8x128xf32>
    %254 = arith.addf %250, %253 : vector<8x128xf32>
    %c4_135 = arith.constant 4 : index
    %255 = memref.load %arg3[%c4_135] : memref<5xf32, #tpu.memory_space<smem>>
    %256 = vector.broadcast %255 : f32 to vector<8x128xf32>
    %257 = arith.addf %254, %256 : vector<8x128xf32>
    %cst_136 = arith.constant 5.000000e-01 : f32
    %258 = vector.broadcast %cst_136 : f32 to vector<8x128xf32>
    %259 = arith.mulf %258, %257 : vector<8x128xf32>
    %260 = math.tanh %259 : vector<8x128xf32>
    %cst_137 = arith.constant 5.000000e-01 : f32
    %261 = vector.broadcast %cst_137 : f32 to vector<8x128xf32>
    %262 = arith.mulf %261, %260 : vector<8x128xf32>
    %cst_138 = arith.constant 5.000000e-01 : f32
    %263 = vector.broadcast %cst_138 : f32 to vector<8x128xf32>
    %264 = arith.addf %262, %263 : vector<8x128xf32>
    %c0_139 = arith.constant 0 : index
    %c0_140 = arith.constant 0 : index
    %265 = memref.load %arg4[%c0_139, %c0_140] : memref<2x5xf32, #tpu.memory_space<smem>>
    %266 = vector.broadcast %265 : f32 to vector<8x128xf32>
    %267 = arith.mulf %68, %266 : vector<8x128xf32>
    %c0_141 = arith.constant 0 : index
    %c1_142 = arith.constant 1 : index
    %268 = memref.load %arg4[%c0_141, %c1_142] : memref<2x5xf32, #tpu.memory_space<smem>>
    %269 = vector.broadcast %268 : f32 to vector<8x128xf32>
    %270 = arith.mulf %117, %269 : vector<8x128xf32>
    %271 = arith.addf %267, %270 : vector<8x128xf32>
    %c0_143 = arith.constant 0 : index
    %c2_144 = arith.constant 2 : index
    %272 = memref.load %arg4[%c0_143, %c2_144] : memref<2x5xf32, #tpu.memory_space<smem>>
    %273 = vector.broadcast %272 : f32 to vector<8x128xf32>
    %274 = arith.mulf %166, %273 : vector<8x128xf32>
    %275 = arith.addf %271, %274 : vector<8x128xf32>
    %c0_145 = arith.constant 0 : index
    %c3_146 = arith.constant 3 : index
    %276 = memref.load %arg4[%c0_145, %c3_146] : memref<2x5xf32, #tpu.memory_space<smem>>
    %277 = vector.broadcast %276 : f32 to vector<8x128xf32>
    %278 = arith.mulf %215, %277 : vector<8x128xf32>
    %279 = arith.addf %275, %278 : vector<8x128xf32>
    %c0_147 = arith.constant 0 : index
    %c4_148 = arith.constant 4 : index
    %280 = memref.load %arg4[%c0_147, %c4_148] : memref<2x5xf32, #tpu.memory_space<smem>>
    %281 = vector.broadcast %280 : f32 to vector<8x128xf32>
    %282 = arith.mulf %264, %281 : vector<8x128xf32>
    %283 = arith.addf %279, %282 : vector<8x128xf32>
    %c0_149 = arith.constant 0 : index
    %284 = memref.load %arg5[%c0_149] : memref<2xf32, #tpu.memory_space<smem>>
    %285 = vector.broadcast %284 : f32 to vector<8x128xf32>
    %286 = arith.addf %283, %285 : vector<8x128xf32>
    %cst_150 = arith.constant 5.000000e-01 : f32
    %287 = vector.broadcast %cst_150 : f32 to vector<8x128xf32>
    %288 = arith.mulf %287, %286 : vector<8x128xf32>
    %289 = math.tanh %288 : vector<8x128xf32>
    %cst_151 = arith.constant 5.000000e-01 : f32
    %290 = vector.broadcast %cst_151 : f32 to vector<8x128xf32>
    %291 = arith.mulf %290, %289 : vector<8x128xf32>
    %cst_152 = arith.constant 5.000000e-01 : f32
    %292 = vector.broadcast %cst_152 : f32 to vector<8x128xf32>
    %293 = arith.addf %291, %292 : vector<8x128xf32>
    %c1_153 = arith.constant 1 : index
    %c0_154 = arith.constant 0 : index
    %294 = memref.load %arg4[%c1_153, %c0_154] : memref<2x5xf32, #tpu.memory_space<smem>>
    %295 = vector.broadcast %294 : f32 to vector<8x128xf32>
    %296 = arith.mulf %68, %295 : vector<8x128xf32>
    %c1_155 = arith.constant 1 : index
    %c1_156 = arith.constant 1 : index
    %297 = memref.load %arg4[%c1_155, %c1_156] : memref<2x5xf32, #tpu.memory_space<smem>>
    %298 = vector.broadcast %297 : f32 to vector<8x128xf32>
    %299 = arith.mulf %117, %298 : vector<8x128xf32>
    %300 = arith.addf %296, %299 : vector<8x128xf32>
    %c1_157 = arith.constant 1 : index
    %c2_158 = arith.constant 2 : index
    %301 = memref.load %arg4[%c1_157, %c2_158] : memref<2x5xf32, #tpu.memory_space<smem>>
    %302 = vector.broadcast %301 : f32 to vector<8x128xf32>
    %303 = arith.mulf %166, %302 : vector<8x128xf32>
    %304 = arith.addf %300, %303 : vector<8x128xf32>
    %c1_159 = arith.constant 1 : index
    %c3_160 = arith.constant 3 : index
    %305 = memref.load %arg4[%c1_159, %c3_160] : memref<2x5xf32, #tpu.memory_space<smem>>
    %306 = vector.broadcast %305 : f32 to vector<8x128xf32>
    %307 = arith.mulf %215, %306 : vector<8x128xf32>
    %308 = arith.addf %304, %307 : vector<8x128xf32>
    %c1_161 = arith.constant 1 : index
    %c4_162 = arith.constant 4 : index
    %309 = memref.load %arg4[%c1_161, %c4_162] : memref<2x5xf32, #tpu.memory_space<smem>>
    %310 = vector.broadcast %309 : f32 to vector<8x128xf32>
    %311 = arith.mulf %264, %310 : vector<8x128xf32>
    %312 = arith.addf %308, %311 : vector<8x128xf32>
    %c1_163 = arith.constant 1 : index
    %313 = memref.load %arg5[%c1_163] : memref<2xf32, #tpu.memory_space<smem>>
    %314 = vector.broadcast %313 : f32 to vector<8x128xf32>
    %315 = arith.addf %312, %314 : vector<8x128xf32>
    %cst_164 = arith.constant 5.000000e-01 : f32
    %316 = vector.broadcast %cst_164 : f32 to vector<8x128xf32>
    %317 = arith.mulf %316, %315 : vector<8x128xf32>
    %318 = math.tanh %317 : vector<8x128xf32>
    %cst_165 = arith.constant 5.000000e-01 : f32
    %319 = vector.broadcast %cst_165 : f32 to vector<8x128xf32>
    %320 = arith.mulf %319, %318 : vector<8x128xf32>
    %cst_166 = arith.constant 5.000000e-01 : f32
    %321 = vector.broadcast %cst_166 : f32 to vector<8x128xf32>
    %322 = arith.addf %320, %321 : vector<8x128xf32>
    %c0_167 = arith.constant 0 : index
    %c0_168 = arith.constant 0 : index
    %323 = memref.load %arg6[%c0_167, %c0_168] : memref<1x2xf32, #tpu.memory_space<smem>>
    %324 = vector.broadcast %323 : f32 to vector<8x128xf32>
    %325 = arith.mulf %293, %324 : vector<8x128xf32>
    %c0_169 = arith.constant 0 : index
    %c1_170 = arith.constant 1 : index
    %326 = memref.load %arg6[%c0_169, %c1_170] : memref<1x2xf32, #tpu.memory_space<smem>>
    %327 = vector.broadcast %326 : f32 to vector<8x128xf32>
    %328 = arith.mulf %322, %327 : vector<8x128xf32>
    %329 = arith.addf %325, %328 : vector<8x128xf32>
    %c0_171 = arith.constant 0 : index
    %330 = memref.load %arg7[%c0_171] : memref<1xf32, #tpu.memory_space<smem>>
    %331 = vector.broadcast %330 : f32 to vector<8x128xf32>
    %332 = arith.addf %329, %331 : vector<8x128xf32>
    %cst_172 = arith.constant 5.000000e-01 : f32
    %333 = vector.broadcast %cst_172 : f32 to vector<8x128xf32>
    %334 = arith.mulf %333, %332 : vector<8x128xf32>
    %335 = math.tanh %334 : vector<8x128xf32>
    %cst_173 = arith.constant 5.000000e-01 : f32
    %336 = vector.broadcast %cst_173 : f32 to vector<8x128xf32>
    %337 = arith.mulf %336, %335 : vector<8x128xf32>
    %cst_174 = arith.constant 5.000000e-01 : f32
    %338 = vector.broadcast %cst_174 : f32 to vector<8x128xf32>
    %339 = arith.addf %337, %338 : vector<8x128xf32>
    %c0_175 = arith.constant 0 : index
    %c0_176 = arith.constant 0 : index
    %c0_177 = arith.constant 0 : index
    %340 = vector.load %arg8[%c0_175, %c0_176, %c0_177] : memref<1x8x128xf32, #tpu.memory_space<vmem>>, vector<1x8x128xf32>
    %341 = vector.shape_cast %340 : vector<1x8x128xf32> to vector<8x128xf32>
    %342 = vector.shape_cast %339 : vector<8x128xf32> to vector<1x8x128xf32>
    tpu.vector_store %arg8[%c0_175, %c0_176, %c0_177], %342 {strides = array<i32>} : memref<1x8x128xf32, #tpu.memory_space<vmem>>, vector<1x8x128xf32>,
    return
  }
  func.func @transform_0(%arg0: i32) -> (i32, i32, i32) {
    %c0_i32 = arith.constant 0 : i32
    %c0_i32_0 = arith.constant 0 : i32
    %c0_i32_1 = arith.constant 0 : i32
    return %c0_i32, %c0_i32_0, %arg0 : i32, i32, i32
  }
  func.func @transform_1(%arg0: i32) -> (i32, i32) {
    %c0_i32 = arith.constant 0 : i32
    %c0_i32_0 = arith.constant 0 : i32
    %c0_i32_1 = arith.constant 0 : i32
    return %c0_i32, %c0_i32_0 : i32, i32
  }
  func.func @transform_2(%arg0: i32) -> i32 {
    %c0_i32 = arith.constant 0 : i32
    %c0_i32_0 = arith.constant 0 : i32
    return %c0_i32 : i32
  }
  func.func @transform_3(%arg0: i32) -> (i32, i32) {
    %c0_i32 = arith.constant 0 : i32
    %c0_i32_0 = arith.constant 0 : i32
    %c0_i32_1 = arith.constant 0 : i32
    return %c0_i32, %c0_i32_0 : i32, i32
  }
  func.func @transform_4(%arg0: i32) -> i32 {
    %c0_i32 = arith.constant 0 : i32
    %c0_i32_0 = arith.constant 0 : i32
    return %c0_i32 : i32
  }
  func.func @transform_5(%arg0: i32) -> (i32, i32) {
    %c0_i32 = arith.constant 0 : i32
    %c0_i32_0 = arith.constant 0 : i32
    %c0_i32_1 = arith.constant 0 : i32
    return %c0_i32, %c0_i32_0 : i32, i32
  }
  func.func @transform_6(%arg0: i32) -> i32 {
    %c0_i32 = arith.constant 0 : i32
    %c0_i32_0 = arith.constant 0 : i32
    return %c0_i32 : i32
  }
  func.func @transform_7(%arg0: i32) -> (i32, i32, i32) {
    %c0_i32 = arith.constant 0 : i32
    %c0_i32_0 = arith.constant 0 : i32
    %c0_i32_1 = arith.constant 0 : i32
    return %c0_i32, %c0_i32_0, %arg0 : i32, i32, i32
  }
}

</mosaic_0001>

<llo_original>
// kernel: mlp_forward.1
$region0: #{mlp_forward.1}
  #allocation0 [shape = 'u32[]', space=smem, size = 0x4, offset = 0x4, fixed_abs, tag = 'smem constant byte address 0x4 - core index']
  #allocation1 [shape = 'u32[144,128]{1,0:T(1,128)}', space=vmem, size = 0x12000, scoped, tag = 'internal scratch']
  #allocation2 [shape = 'f32[1]{0:T(128)S(6)}', space=smem, size = 0x200, scoped, tag = 'scoped memory for mlp_forward.1']
  %s0 = inlined_call_operand.vmem [shape: f32[10,8,128], index: 0, kind: input, shape index: {}]
  %s1 = inlined_call_operand.vmem [shape: f32[5,10], index: 1, kind: input, shape index: {}]
  %s2 = inlined_call_operand.vmem [shape: f32[5], index: 2, kind: input, shape index: {}]
  %s3 = inlined_call_operand.vmem [shape: f32[2,5], index: 3, kind: input, shape index: {}]
  %s4 = inlined_call_operand.vmem [shape: f32[2], index: 4, kind: input, shape index: {}]
  %s5 = inlined_call_operand.vmem [shape: f32[1,2], index: 5, kind: input, shape index: {}]
  %s6 = inlined_call_operand.<no memory space> [shape: f32[1], index: 6, kind: input, shape index: {}]
  %s7 = inlined_call_operand.vmem [shape: f32[1,8,128], index: 7, kind: output, shape index: {}]
  %s8 = sld [smem:[#allocation0]]
  $region58: #{mlp_forward.1} parent=0
    _
  %s10 = ssub.s32 1, %s8
  %s11 = scalar_select 0, %s10, %s8
  %12 = sst [smem:[#allocation2]] %s6
  $region1: #{mlp_forward.1} parent=0
    #allocation3 [shape = 'u8[4096]{0}', space=smem, size = 0x1000, scoped, tag = 'input window, operand 1, single buffered']
    #allocation4 [shape = 's32[1]{0}', space=sflag, size = 0x4, scoped, tag = 'scoped memory for mlp_forward.1']
    #allocation5 [shape = 'u8[512]{0}', space=smem, size = 0x200, scoped, tag = 'input window, operand 2, single buffered']
    #allocation6 [shape = 's32[1]{0}', space=sflag, size = 0x4, scoped, tag = 'scoped memory for mlp_forward.1']
    #allocation7 [shape = 'u8[1024]{0}', space=smem, size = 0x400, scoped, tag = 'input window, operand 3, single buffered']
    #allocation8 [shape = 'u8[512]{0}', space=smem, size = 0x200, scoped, tag = 'input window, operand 4, single buffered']
    #allocation9 [shape = 's32[1]{0}', space=sflag, size = 0x4, scoped, tag = 'scoped memory for mlp_forward.1']
    #allocation10 [shape = 'u8[512]{0}', space=smem, size = 0x200, scoped, tag = 'input window, operand 5, single buffered']
    %13 = vsyncpa [#allocation4], 0
    %14 = vsyncpa [#allocation6], 0
    %15 = vsyncpa [#allocation9], 0
    // Predicated region
    $region2: #{mlp_forward.1} parent=1 // pred_check
      _
    $region3: #{mlp_forward.1} parent=1 // pred_check_branch
      %17 = sbr.rel (0) target = $region5
    $region4: #{mlp_forward.1} parent=1 // pred_region
      _
    $region5: #{mlp_forward.1} parent=1 // pred_fallthru
      _
    // Predicated region
    $region6: #{mlp_forward.1} parent=1 // pred_check
      _
    $region7: #{mlp_forward.1} parent=1 // pred_check_branch
      %19 = sbr.rel (0) target = $region9
    $region8: #{mlp_forward.1} parent=1 // pred_region
      %s21 = ssub.s32 128, 128
      %22 = vsyncadd [#allocation4], %s21
      %s24 = sshll.u32 %s1, 4
      %s25 = int_to_ptr.vmem [resolvable:$true] %s24
      %27 = dma.vmem_to_smem %s25, 128, [#allocation3], [#allocation4]
    $region9: #{mlp_forward.1} parent=1 // pred_fallthru
      _
    // Predicated region
    $region10: #{mlp_forward.1} parent=1 // pred_check
      _
    $region11: #{mlp_forward.1} parent=1 // pred_check_branch
      %29 = sbr.rel (0) target = $region13
    $region12: #{mlp_forward.1} parent=1 // pred_region
      %s31 = ssub.s32 16, 16
      %32 = vsyncadd [#allocation6], %s31
      %s34 = sshll.u32 %s2, 4
      %s35 = int_to_ptr.vmem [resolvable:$true] %s34
      %37 = dma.vmem_to_smem %s35, 16, [#allocation5], [#allocation6]
    $region13: #{mlp_forward.1} parent=1 // pred_fallthru
      _
    // Predicated region
    $region14: #{mlp_forward.1} parent=1 // pred_check
      _
    $region15: #{mlp_forward.1} parent=1 // pred_check_branch
      %39 = sbr.rel (0) target = $region17
    $region16: #{mlp_forward.1} parent=1 // pred_region
      %s41 = ssub.s32 32, 32
      %42 = vsyncadd [#allocation6], %s41
      %s44 = sshll.u32 %s3, 4
      %s45 = int_to_ptr.vmem [resolvable:$true] %s44
      %47 = dma.vmem_to_smem %s45, 32, [#allocation7], [#allocation6]
    $region17: #{mlp_forward.1} parent=1 // pred_fallthru
      _
    // Predicated region
    $region18: #{mlp_forward.1} parent=1 // pred_check
      _
    $region19: #{mlp_forward.1} parent=1 // pred_check_branch
      %49 = sbr.rel (0) target = $region21
    $region20: #{mlp_forward.1} parent=1 // pred_region
      %s51 = ssub.s32 16, 16
      %52 = vsyncadd [#allocation9], %s51
      %s54 = sshll.u32 %s4, 4
      %s55 = int_to_ptr.vmem [resolvable:$true] %s54
      %57 = dma.vmem_to_smem %s55, 16, [#allocation8], [#allocation9]
    $region21: #{mlp_forward.1} parent=1 // pred_fallthru
      _
    // Predicated region
    $region22: #{mlp_forward.1} parent=1 // pred_check
      _
    $region23: #{mlp_forward.1} parent=1 // pred_check_branch
      %59 = sbr.rel (0) target = $region25
    $region24: #{mlp_forward.1} parent=1 // pred_region
      %s61 = ssub.s32 16, 16
      %62 = vsyncadd [#allocation9], %s61
      %s64 = sshll.u32 %s5, 4
      %s65 = int_to_ptr.vmem [resolvable:$true] %s64
      %67 = dma.vmem_to_smem %s65, 16, [#allocation10], [#allocation9]
    $region25: #{mlp_forward.1} parent=1 // pred_fallthru
      _
    // Predicated region
    $region26: #{mlp_forward.1} parent=1 // pred_check
      _
    $region27: #{mlp_forward.1} parent=1 // pred_check_branch
      %69 = sbr.rel (0) target = $region29
    $region28: #{mlp_forward.1} parent=1 // pred_region
      _
    $region29: #{mlp_forward.1} parent=1 // pred_fallthru
      _
    // Predicated region
    $region30: #{mlp_forward.1} parent=1 // pred_check
      _
    $region31: #{mlp_forward.1} parent=1 // pred_check_branch
      %71 = sbr.rel (0) target = $region33
    $region32: #{mlp_forward.1} parent=1 // pred_region
      %72 = dma.done [#allocation4], 128
    $region33: #{mlp_forward.1} parent=1 // pred_fallthru
      _
    // Predicated region
    $region34: #{mlp_forward.1} parent=1 // pred_check
      _
    $region35: #{mlp_forward.1} parent=1 // pred_check_branch
      %74 = sbr.rel (0) target = $region37
    $region36: #{mlp_forward.1} parent=1 // pred_region
      %75 = dma.done [#allocation6], 16
    $region37: #{mlp_forward.1} parent=1 // pred_fallthru
      _
    // Predicated region
    $region38: #{mlp_forward.1} parent=1 // pred_check
      _
    $region39: #{mlp_forward.1} parent=1 // pred_check_branch
      %77 = sbr.rel (0) target = $region41
    $region40: #{mlp_forward.1} parent=1 // pred_region
      %78 = dma.done [#allocation6], 32
    $region41: #{mlp_forward.1} parent=1 // pred_fallthru
      _
    // Predicated region
    $region42: #{mlp_forward.1} parent=1 // pred_check
      _
    $region43: #{mlp_forward.1} parent=1 // pred_check_branch
      %80 = sbr.rel (0) target = $region45
    $region44: #{mlp_forward.1} parent=1 // pred_region
      %81 = dma.done [#allocation9], 16
    $region45: #{mlp_forward.1} parent=1 // pred_fallthru
      _
    // Predicated region
    $region46: #{mlp_forward.1} parent=1 // pred_check
      _
    $region47: #{mlp_forward.1} parent=1 // pred_check_branch
      %83 = sbr.rel (0) target = $region49
    $region48: #{mlp_forward.1} parent=1 // pred_region
      %84 = dma.done [#allocation9], 16
    $region49: #{mlp_forward.1} parent=1 // pred_fallthru
      _
    %85 = sfence
    %v86 = vld [vmem:[%s0] sm:$0xff]
    %s87 = scalar_lea.vmem %s0, 8
    %v88 = vld [vmem:[%s87] sm:$0xff]
    %s89 = scalar_lea.vmem %s0, 16
    %v90 = vld [vmem:[%s89] sm:$0xff]
    %s91 = scalar_lea.vmem %s0, 24
    %v92 = vld [vmem:[%s91] sm:$0xff]
    %s93 = scalar_lea.vmem %s0, 32
    %v94 = vld [vmem:[%s93] sm:$0xff]
    %s95 = scalar_lea.vmem %s0, 40
    %v96 = vld [vmem:[%s95] sm:$0xff]
    %s97 = scalar_lea.vmem %s0, 48
    %v98 = vld [vmem:[%s97] sm:$0xff]
    %s99 = scalar_lea.vmem %s0, 56
    %v100 = vld [vmem:[%s99] sm:$0xff]
    %s101 = scalar_lea.vmem %s0, 64
    %v102 = vld [vmem:[%s101] sm:$0xff]
    %s103 = scalar_lea.vmem %s0, 72
    %v104 = vld [vmem:[%s103] sm:$0xff]
    %s105 = sld [smem:[#allocation3]]
    %v106 = vstv %s105
    %v107 = vmul.f32 %v86, %v106
    %s108 = sld [smem:[#allocation3 + $0x1]]
    %v109 = vstv %s108
    %v110 = vmul.f32 %v88, %v109
    %v111 = vadd.f32 %v107, %v110
    %s112 = sld [smem:[#allocation3 + $0x2]]
    %v113 = vstv %s112
    %v114 = vmul.f32 %v90, %v113
    %v115 = vadd.f32 %v111, %v114
    %s116 = sld [smem:[#allocation3 + $0x3]]
    %v117 = vstv %s116
    %v118 = vmul.f32 %v92, %v117
    %v119 = vadd.f32 %v115, %v118
    %s120 = sld [smem:[#allocation3 + $0x4]]
    %v121 = vstv %s120
    %v122 = vmul.f32 %v94, %v121
    %v123 = vadd.f32 %v119, %v122
    %s124 = sld [smem:[#allocation3 + $0x5]]
    %v125 = vstv %s124
    %v126 = vmul.f32 %v96, %v125
    %v127 = vadd.f32 %v123, %v126
    %s128 = sld [smem:[#allocation3 + $0x6]]
    %v129 = vstv %s128
    %v130 = vmul.f32 %v98, %v129
    %v131 = vadd.f32 %v127, %v130
    %s132 = sld [smem:[#allocation3 + $0x7]]
    %v133 = vstv %s132
    %v134 = vmul.f32 %v100, %v133
    %v135 = vadd.f32 %v131, %v134
    %s136 = sld [smem:[#allocation3 + $0x8]]
    %v137 = vstv %s136
    %v138 = vmul.f32 %v102, %v137
    %v139 = vadd.f32 %v135, %v138
    %s140 = sld [smem:[#allocation3 + $0x9]]
    %v141 = vstv %s140
    %v142 = vmul.f32 %v104, %v141
    %v143 = vadd.f32 %v139, %v142
    %s144 = sld [smem:[#allocation5]]
    %v145 = vstv %s144
    %v146 = vadd.f32 %v143, %v145
    %v147 = vmul.f32 %v146, 0.5
    %v148 = vtanh.pop %v147
    %v149 = vmul.f32 %v148, 0.5
    %v150 = vadd.f32 %v149, 0.5
    %s151 = sld [smem:[#allocation3 + $0x80]]
    %v152 = vstv %s151
    %v153 = vmul.f32 %v86, %v152
    %s154 = sld [smem:[#allocation3 + $0x81]]
    %v155 = vstv %s154
    %v156 = vmul.f32 %v88, %v155
    %v157 = vadd.f32 %v153, %v156
    %s158 = sld [smem:[#allocation3 + $0x82]]
    %v159 = vstv %s158
    %v160 = vmul.f32 %v90, %v159
    %v161 = vadd.f32 %v157, %v160
    %s162 = sld [smem:[#allocation3 + $0x83]]
    %v163 = vstv %s162
    %v164 = vmul.f32 %v92, %v163
    %v165 = vadd.f32 %v161, %v164
    %s166 = sld [smem:[#allocation3 + $0x84]]
    %v167 = vstv %s166
    %v168 = vmul.f32 %v94, %v167
    %v169 = vadd.f32 %v165, %v168
    %s170 = sld [smem:[#allocation3 + $0x85]]
    %v171 = vstv %s170
    %v172 = vmul.f32 %v96, %v171
    %v173 = vadd.f32 %v169, %v172
    %s174 = sld [smem:[#allocation3 + $0x86]]
    %v175 = vstv %s174
    %v176 = vmul.f32 %v98, %v175
    %v177 = vadd.f32 %v173, %v176
    %s178 = sld [smem:[#allocation3 + $0x87]]
    %v179 = vstv %s178
    %v180 = vmul.f32 %v100, %v179
    %v181 = vadd.f32 %v177, %v180
    %s182 = sld [smem:[#allocation3 + $0x88]]
    %v183 = vstv %s182
    %v184 = vmul.f32 %v102, %v183
    %v185 = vadd.f32 %v181, %v184
    %s186 = sld [smem:[#allocation3 + $0x89]]
    %v187 = vstv %s186
    %v188 = vmul.f32 %v104, %v187
    %v189 = vadd.f32 %v185, %v188
    %s190 = sld [smem:[#allocation5 + $0x1]]
    %v191 = vstv %s190
    %v192 = vadd.f32 %v189, %v191
    %v193 = vmul.f32 %v192, 0.5
    %v194 = vtanh.pop %v193
    %v195 = vmul.f32 %v194, 0.5
    %v196 = vadd.f32 %v195, 0.5
    %s197 = sld [smem:[#allocation3 + $0x100]]
    %v198 = vstv %s197
    %v199 = vmul.f32 %v86, %v198
    %s200 = sld [smem:[#allocation3 + $0x101]]
    %v201 = vstv %s200
    %v202 = vmul.f32 %v88, %v201
    %v203 = vadd.f32 %v199, %v202
    %s204 = sld [smem:[#allocation3 + $0x102]]
    %v205 = vstv %s204
    %v206 = vmul.f32 %v90, %v205
    %v207 = vadd.f32 %v203, %v206
    %s208 = sld [smem:[#allocation3 + $0x103]]
    %v209 = vstv %s208
    %v210 = vmul.f32 %v92, %v209
    %v211 = vadd.f32 %v207, %v210
    %s212 = sld [smem:[#allocation3 + $0x104]]
    %v213 = vstv %s212
    %v214 = vmul.f32 %v94, %v213
    %v215 = vadd.f32 %v211, %v214
    %s216 = sld [smem:[#allocation3 + $0x105]]
    %v217 = vstv %s216
    %v218 = vmul.f32 %v96, %v217
    %v219 = vadd.f32 %v215, %v218
    %s220 = sld [smem:[#allocation3 + $0x106]]
    %v221 = vstv %s220
    %v222 = vmul.f32 %v98, %v221
    %v223 = vadd.f32 %v219, %v222
    %s224 = sld [smem:[#allocation3 + $0x107]]
    %v225 = vstv %s224
    %v226 = vmul.f32 %v100, %v225
    %v227 = vadd.f32 %v223, %v226
    %s228 = sld [smem:[#allocation3 + $0x108]]
    %v229 = vstv %s228
    %v230 = vmul.f32 %v102, %v229
    %v231 = vadd.f32 %v227, %v230
    %s232 = sld [smem:[#allocation3 + $0x109]]
    %v233 = vstv %s232
    %v234 = vmul.f32 %v104, %v233
    %v235 = vadd.f32 %v231, %v234
    %s236 = sld [smem:[#allocation5 + $0x2]]
    %v237 = vstv %s236
    %v238 = vadd.f32 %v235, %v237
    %v239 = vmul.f32 %v238, 0.5
    %v240 = vtanh.pop %v239
    %v241 = vmul.f32 %v240, 0.5
    %v242 = vadd.f32 %v241, 0.5
    %s243 = sld [smem:[#allocation3 + $0x180]]
    %v244 = vstv %s243
    %v245 = vmul.f32 %v86, %v244
    %s246 = sld [smem:[#allocation3 + $0x181]]
    %v247 = vstv %s246
    %v248 = vmul.f32 %v88, %v247
    %v249 = vadd.f32 %v245, %v248
    %s250 = sld [smem:[#allocation3 + $0x182]]
    %v251 = vstv %s250
    %v252 = vmul.f32 %v90, %v251
    %v253 = vadd.f32 %v249, %v252
    %s254 = sld [smem:[#allocation3 + $0x183]]
    %v255 = vstv %s254
    %v256 = vmul.f32 %v92, %v255
    %v257 = vadd.f32 %v253, %v256
    %s258 = sld [smem:[#allocation3 + $0x184]]
    %v259 = vstv %s258
    %v260 = vmul.f32 %v94, %v259
    %v261 = vadd.f32 %v257, %v260
    %s262 = sld [smem:[#allocation3 + $0x185]]
    %v263 = vstv %s262
    %v264 = vmul.f32 %v96, %v263
    %v265 = vadd.f32 %v261, %v264
    %s266 = sld [smem:[#allocation3 + $0x186]]
    %v267 = vstv %s266
    %v268 = vmul.f32 %v98, %v267
    %v269 = vadd.f32 %v265, %v268
    %s270 = sld [smem:[#allocation3 + $0x187]]
    %v271 = vstv %s270
    %v272 = vmul.f32 %v100, %v271
    %v273 = vadd.f32 %v269, %v272
    %s274 = sld [smem:[#allocation3 + $0x188]]
    %v275 = vstv %s274
    %v276 = vmul.f32 %v102, %v275
    %v277 = vadd.f32 %v273, %v276
    %s278 = sld [smem:[#allocation3 + $0x189]]
    %v279 = vstv %s278
    %v280 = vmul.f32 %v104, %v279
    %v281 = vadd.f32 %v277, %v280
    %s282 = sld [smem:[#allocation5 + $0x3]]
    %v283 = vstv %s282
    %v284 = vadd.f32 %v281, %v283
    %v285 = vmul.f32 %v284, 0.5
    %v286 = vtanh.pop %v285
    %v287 = vmul.f32 %v286, 0.5
    %v288 = vadd.f32 %v287, 0.5
    %s289 = sld [smem:[#allocation3 + $0x200]]
    %v290 = vstv %s289
    %v291 = vmul.f32 %v86, %v290
    %s292 = sld [smem:[#allocation3 + $0x201]]
    %v293 = vstv %s292
    %v294 = vmul.f32 %v88, %v293
    %v295 = vadd.f32 %v291, %v294
    %s296 = sld [smem:[#allocation3 + $0x202]]
    %v297 = vstv %s296
    %v298 = vmul.f32 %v90, %v297
    %v299 = vadd.f32 %v295, %v298
    %s300 = sld [smem:[#allocation3 + $0x203]]
    %v301 = vstv %s300
    %v302 = vmul.f32 %v92, %v301
    %v303 = vadd.f32 %v299, %v302
    %s304 = sld [smem:[#allocation3 + $0x204]]
    %v305 = vstv %s304
    %v306 = vmul.f32 %v94, %v305
    %v307 = vadd.f32 %v303, %v306
    %s308 = sld [smem:[#allocation3 + $0x205]]
    %v309 = vstv %s308
    %v310 = vmul.f32 %v96, %v309
    %v311 = vadd.f32 %v307, %v310
    %s312 = sld [smem:[#allocation3 + $0x206]]
    %v313 = vstv %s312
    %v314 = vmul.f32 %v98, %v313
    %v315 = vadd.f32 %v311, %v314
    %s316 = sld [smem:[#allocation3 + $0x207]]
    %v317 = vstv %s316
    %v318 = vmul.f32 %v100, %v317
    %v319 = vadd.f32 %v315, %v318
    %s320 = sld [smem:[#allocation3 + $0x208]]
    %v321 = vstv %s320
    %v322 = vmul.f32 %v102, %v321
    %v323 = vadd.f32 %v319, %v322
    %s324 = sld [smem:[#allocation3 + $0x209]]
    %v325 = vstv %s324
    %v326 = vmul.f32 %v104, %v325
    %v327 = vadd.f32 %v323, %v326
    %s328 = sld [smem:[#allocation5 + $0x4]]
    %v329 = vstv %s328
    %v330 = vadd.f32 %v327, %v329
    %v331 = vmul.f32 %v330, 0.5
    %v332 = vtanh.pop %v331
    %v333 = vmul.f32 %v332, 0.5
    %v334 = vadd.f32 %v333, 0.5
    %s335 = sld [smem:[#allocation7]]
    %v336 = vstv %s335
    %v337 = vmul.f32 %v150, %v336
    %s338 = sld [smem:[#allocation7 + $0x1]]
    %v339 = vstv %s338
    %v340 = vmul.f32 %v196, %v339
    %v341 = vadd.f32 %v337, %v340
    %s342 = sld [smem:[#allocation7 + $0x2]]
    %v343 = vstv %s342
    %v344 = vmul.f32 %v242, %v343
    %v345 = vadd.f32 %v341, %v344
    %s346 = sld [smem:[#allocation7 + $0x3]]
    %v347 = vstv %s346
    %v348 = vmul.f32 %v288, %v347
    %v349 = vadd.f32 %v345, %v348
    %s350 = sld [smem:[#allocation7 + $0x4]]
    %v351 = vstv %s350
    %v352 = vmul.f32 %v334, %v351
    %v353 = vadd.f32 %v349, %v352
    %s354 = sld [smem:[#allocation8]]
    %v355 = vstv %s354
    %v356 = vadd.f32 %v353, %v355
    %v357 = vmul.f32 %v356, 0.5
    %v358 = vtanh.pop %v357
    %v359 = vmul.f32 %v358, 0.5
    %v360 = vadd.f32 %v359, 0.5
    %s361 = sld [smem:[#allocation7 + $0x80]]
    %v362 = vstv %s361
    %v363 = vmul.f32 %v150, %v362
    %s364 = sld [smem:[#allocation7 + $0x81]]
    %v365 = vstv %s364
    %v366 = vmul.f32 %v196, %v365
    %v367 = vadd.f32 %v363, %v366
    %s368 = sld [smem:[#allocation7 + $0x82]]
    %v369 = vstv %s368
    %v370 = vmul.f32 %v242, %v369
    %v371 = vadd.f32 %v367, %v370
    %s372 = sld [smem:[#allocation7 + $0x83]]
    %v373 = vstv %s372
    %v374 = vmul.f32 %v288, %v373
    %v375 = vadd.f32 %v371, %v374
    %s376 = sld [smem:[#allocation7 + $0x84]]
    %v377 = vstv %s376
    %v378 = vmul.f32 %v334, %v377
    %v379 = vadd.f32 %v375, %v378
    %s380 = sld [smem:[#allocation8 + $0x1]]
    %v381 = vstv %s380
    %v382 = vadd.f32 %v379, %v381
    %v383 = vmul.f32 %v382, 0.5
    %v384 = vtanh.pop %v383
    %v385 = vmul.f32 %v384, 0.5
    %v386 = vadd.f32 %v385, 0.5
    %s387 = sld [smem:[#allocation10]]
    %v388 = vstv %s387
    %v389 = vmul.f32 %v360, %v388
    %s390 = sld [smem:[#allocation10 + $0x1]]
    %v391 = vstv %s390
    %v392 = vmul.f32 %v386, %v391
    %v393 = vadd.f32 %v389, %v392
    %s394 = sld [smem:[#allocation2]]
    %v395 = vstv %s394
    %v396 = vadd.f32 %v393, %v395
    %v397 = vmul.f32 %v396, 0.5
    %v398 = vtanh.pop %v397
    %v399 = vmul.f32 %v398, 0.5
    %v400 = vadd.f32 %v399, 0.5
    %401 = vst [vmem:[%s7] sm:$0xff] %v400
    // Predicated region
    $region50: #{mlp_forward.1} parent=1 // pred_check
      _
    $region51: #{mlp_forward.1} parent=1 // pred_check_branch
      %403 = sbr.rel (0) target = $region53
    $region52: #{mlp_forward.1} parent=1 // pred_region
      _
    $region53: #{mlp_forward.1} parent=1 // pred_fallthru
      _
    // Predicated region
    $region54: #{mlp_forward.1} parent=1 // pred_check
      _
    $region55: #{mlp_forward.1} parent=1 // pred_check_branch
      %405 = sbr.rel (0) target = $region57
    $region56: #{mlp_forward.1} parent=1 // pred_region
      _
    $region57: #{mlp_forward.1} parent=1 // pred_fallthru
      _
    %406 = vsyncpa [#allocation4], 1
    %407 = vsyncpa [#allocation6], 1
    %408 = vsyncpa [#allocation9], 1

</llo_original>
